<compile_context>
chip_gen: v7x
topology: tpu7x:2x2x1
jax: 0.10.0
libtpu: 0.0.40
codegen_flags: <defaults>
</compile_context>

<pallas_src>
import functools

import numpy as np
import jax
import jax.numpy as jnp
from jax import lax
from jax.experimental import pallas as pl
from jax.experimental.pallas import tpu as pltpu


def _sideout_kernel(mask_ref, x_ref, w1_ref, b1_ref, w2_ref, b2_ref, o_ref,
                    *, H, W):
    # mask_ref: (9, HW)      f32 0/1 border-validity mask, one row per tap
    # x_ref:    (1, Cin, HW) one image, channel-major, spatial flattened
    # w1_ref:   (Cmid, 9*Cin) 3x3 conv weights with BN scale folded (tap-major cols)
    # b1_ref:   (Cmid, 1)    folded BN bias
    # w2_ref:   (Cout, Cmid) 1x1 conv weights
    # b2_ref:   (Cout, 1)    1x1 conv bias
    # o_ref:    (1, Cout, HW) output, channel-major, spatial flattened
    HW = H * W
    cmid = w1_ref.shape[0]
    cout = w2_ref.shape[0]

    x = x_ref[0]                                   # (Cin, HW)

    # Build the (9*Cin, HW) im2col patch: tap (dy,dx) needs x[:, p + dy*W + dx].
    taps = []
    for dy in (-1, 0, 1):
        for dx in (-1, 0, 1):
            off = dy * W + dx
            t = (dy + 1) * 3 + (dx + 1)
            if off == 0:
                taps.append(x)                     # center tap never wraps
            else:
                # roll(x, s)[p] == x[(p - s) mod HW]; s = -off gives x[p + off].
                shifted = pltpu.roll(x, shift=(-off) % HW, axis=1)
                # Zero the wrapped (out-of-image) positions (broadcast over Cin).
                taps.append(shifted * mask_ref[t:t + 1, :])
    patch = jnp.concatenate(taps, axis=0)          # (9*Cin, HW)

    # 3x3 conv + folded BN + ReLU: one MXU matmul, K = 9*Cin, N = HW (lane dense).
    y = jnp.dot(w1_ref[...], patch, preferred_element_type=jnp.float32)  # (Cmid, HW)
    y = jnp.maximum(y + b1_ref[...], 0.0)

    # Dropout2d is identity at inference.

    # 1x1 conv + bias.
    if cout == 1 and cmid <= 16:
        # Tiny contraction: VPU weighted channel sum (avoids an M=1/K=tiny MXU push).
        out = w2_ref[:, 0:1] * y[0:1, :]
        for c in range(1, cmid):
            out = out + w2_ref[:, c:c + 1] * y[c:c + 1, :]
        out = out + b2_ref[...]
    else:
        out = jnp.dot(w2_ref[...], y, preferred_element_type=jnp.float32) + b2_ref[...]

    o_ref[...] = out.reshape(1, cout, HW).astype(o_ref.dtype)


def sideout_block(x_nchw, w1, bn_gamma, bn_beta, bn_mean, bn_var, w2, b2,
                  eps=1e-5):
    """x_nchw: (N, Cin, H, W) float32.  Returns (N, Cout, H, W) (inference mode)."""
    N, Cin, H, W = x_nchw.shape
    Cmid = w1.shape[0]            # w1: (Cmid, Cin, 3, 3)  (PyTorch OIHW)
    Cout = w2.shape[0]            # w2: (Cout, Cmid, 1, 1)
    HW = H * W

    # NCHW is already channel-major; only flatten the spatial dims (free reshape,
    # no transpose, no pad -> no extra HBM round trips around the kernel).
    x_flat = x_nchw.reshape(N, Cin, HW)

    # Fold BatchNorm into conv1: scale -> weights, shift -> bias.
    scale = bn_gamma / jnp.sqrt(bn_var + eps)                            # (Cmid,)
    w1_mat = jnp.transpose(w1, (0, 2, 3, 1)).reshape(Cmid, 9 * Cin)      # tap-major cols
    w1_folded = (w1_mat * scale[:, None]).astype(jnp.float32)            # (Cmid, 9*Cin)
    b1 = ((bn_beta - bn_mean * scale)[:, None]).astype(jnp.float32)      # (Cmid, 1)

    w2_mat = w2.reshape(Cout, Cmid).astype(jnp.float32)                  # (Cout, Cmid)
    b2_col = b2.reshape(Cout, 1).astype(jnp.float32)                     # (Cout, 1)

    # Static 0/1 border-validity mask for the 9 taps (compile-time constant;
    # row t = (dy+1)*3 + (dx+1), matching the tap order in the kernel).
    yy, xx = np.meshgrid(np.arange(H), np.arange(W), indexing="ij")
    yy = yy.reshape(-1)
    xx = xx.reshape(-1)
    rows = []
    for dy in (-1, 0, 1):
        for dx in (-1, 0, 1):
            valid = ((yy + dy >= 0) & (yy + dy < H) &
                     (xx + dx >= 0) & (xx + dx < W)).astype(np.float32)  # (HW,)
            rows.append(valid)
    mask = jnp.asarray(np.stack(rows, axis=0))                           # (9, HW)

    kernel = functools.partial(_sideout_kernel, H=H, W=W)

    cost = pl.CostEstimate(
        flops=int(N * HW * (2 * 9 * Cin * Cmid + 2 * Cmid * Cout)),
        transcendentals=0,
        bytes_accessed=int(4 * (N * Cin * HW + 9 * HW + Cmid * 9 * Cin
                                + Cmid + Cout * Cmid + Cout + N * Cout * HW)),
    )

    # NOTE: whole-image blocks are fine at these sizes; for large images add a
    # row-tiling grid axis (halo handled by the same mask trick) to respect
    # v7x's 64 MiB VMEM.
    out_flat = pl.pallas_call(
        kernel,
        out_shape=jax.ShapeDtypeStruct((N, Cout, HW), jnp.float32),
        grid=(N,),
        in_specs=[
            pl.BlockSpec((9, HW), lambda n: (0, 0)),
            pl.BlockSpec((1, Cin, HW), lambda n: (n, 0, 0)),
            pl.BlockSpec((Cmid, 9 * Cin), lambda n: (0, 0)),
            pl.BlockSpec((Cmid, 1), lambda n: (0, 0)),
            pl.BlockSpec((Cout, Cmid), lambda n: (0, 0)),
            pl.BlockSpec((Cout, 1), lambda n: (0, 0)),
        ],
        out_specs=pl.BlockSpec((1, Cout, HW), lambda n: (n, 0, 0)),
        compiler_params=pltpu.CompilerParams(
            dimension_semantics=("parallel",)),
        cost_estimate=cost,
    )(mask, x_flat, w1_folded, b1, w2_mat, b2_col)

    # Output is already NCHW; just unflatten the spatial dims (free reshape).
    return out_flat.reshape(N, Cout, H, W)


def _reference(x_nchw, w1, bn_gamma, bn_beta, bn_mean, bn_var, w2, b2,
               eps=1e-5):
    """Pure-JAX reference (lax.conv) for verification."""
    y = lax.conv_general_dilated(
        x_nchw, w1, window_strides=(1, 1), padding=((1, 1), (1, 1)),
        dimension_numbers=("NCHW", "OIHW", "NCHW"))
    scale = bn_gamma / jnp.sqrt(bn_var + eps)
    y = y * scale[None, :, None, None] + \
        (bn_beta - bn_mean * scale)[None, :, None, None]
    y = jnp.maximum(y, 0.0)
    y = lax.conv_general_dilated(
        y, w2, window_strides=(1, 1), padding=((0, 0), (0, 0)),
        dimension_numbers=("NCHW", "OIHW", "NCHW"))
    return y + b2[None, :, None, None]


if __name__ == "__main__":
    key = jax.random.PRNGKey(0)
    N, Cin, H, W = 2, 8, 16, 16
    Cmid = Cin // 4
    Cout = 1

    k = jax.random.split(key, 7)
    x = jax.random.normal(k[0], (N, Cin, H, W), dtype=jnp.float32)
    w1 = jax.random.normal(k[1], (Cmid, Cin, 3, 3), dtype=jnp.float32) * 0.1
    bn_gamma = jax.random.uniform(k[2], (Cmid,), minval=0.5, maxval=1.5)
    bn_beta = jax.random.normal(k[3], (Cmid,)) * 0.1
    bn_mean = jax.random.normal(k[4], (Cmid,)) * 0.1
    bn_var = jax.random.uniform(k[5], (Cmid,), minval=0.5, maxval=1.5)
    w2 = jax.random.normal(k[6], (Cout, Cmid, 1, 1), dtype=jnp.float32) * 0.1
    b2 = jnp.arange(Cout, dtype=jnp.float32) * 0.01 + 0.05

    out = sideout_block(x, w1, bn_gamma, bn_beta, bn_mean, bn_var, w2, b2)
    out = jax.block_until_ready(out)

    ref = _reference(x, w1, bn_gamma, bn_beta, bn_mean, bn_var, w2, b2)
    assert out.shape == (N, Cout, H, W)
    assert jnp.allclose(out, ref, atol=1e-4, rtol=1e-4), \
        float(jnp.max(jnp.abs(out - ref)))

    print("KERNEL_OK")
</pallas_src>

<mosaic_0001>
module attributes {stable_mosaic.version = 11 : i64} {
  func.func @_sideout_kernel(%arg0: i32, %arg1: memref<9x256xf32, #tpu.memory_space<vmem>>, %arg2: memref<1x8x256xf32, #tpu.memory_space<vmem>>, %arg3: memref<2x72xf32, #tpu.memory_space<vmem>>, %arg4: memref<2x1xf32, #tpu.memory_space<vmem>>, %arg5: memref<1x2xf32, #tpu.memory_space<vmem>>, %arg6: memref<1x1xf32, #tpu.memory_space<vmem>>, %arg7: memref<1x1x256xf32, #tpu.memory_space<vmem>>) attributes {dimension_semantics = [#tpu.dimension_semantics<parallel>], iteration_bounds = array<i64: 2>, scalar_prefetch = 0 : i64, scratch_operands = 0 : i64, tpu.core_type = #tpu.core_type<tc>, window_params = [{pipeline_mode = #tpu.pipeline_mode<synchronous>, transform_indices = @transform_0, window_bounds = array<i64: 9, 256>}, {transform_indices = @transform_1, window_bounds = array<i64: 1, 8, 256>}, {pipeline_mode = #tpu.pipeline_mode<synchronous>, transform_indices = @transform_2, window_bounds = array<i64: 2, 72>}, {pipeline_mode = #tpu.pipeline_mode<synchronous>, transform_indices = @transform_3, window_bounds = array<i64: 2, 1>}, {pipeline_mode = #tpu.pipeline_mode<synchronous>, transform_indices = @transform_4, window_bounds = array<i64: 1, 2>}, {pipeline_mode = #tpu.pipeline_mode<synchronous>, transform_indices = @transform_5, window_bounds = array<i64: 1, 1>}, {transform_indices = @transform_6, window_bounds = array<i64: 1, 1, 256>}]} {
    %c0 = arith.constant 0 : index
    %c0_0 = arith.constant 0 : index
    %c0_1 = arith.constant 0 : index
    %0 = vector.load %arg2[%c0, %c0_0, %c0_1] : memref<1x8x256xf32, #tpu.memory_space<vmem>>, vector<1x8x256xf32>
    %1 = vector.shape_cast %0 : vector<1x8x256xf32> to vector<8x256xf32>
    %c17_i32 = arith.constant 17 : i32
    %2 = tpu.dynamic_rotate %1 by %c17_i32 dim 1 : vector<8x256xf32>, i32 -> vector<8x256xf32>
    %c0_2 = arith.constant 0 : index
    %c0_3 = arith.constant 0 : index
    %3 = vector.load %arg1[%c0_2, %c0_3] : memref<9x256xf32, #tpu.memory_space<vmem>>, vector<1x256xf32>
    %4 = vector.broadcast %3 : vector<1x256xf32> to vector<8x256xf32>
    %5 = arith.mulf %2, %4 : vector<8x256xf32>
    %c16_i32 = arith.constant 16 : i32
    %6 = tpu.dynamic_rotate %1 by %c16_i32 dim 1 : vector<8x256xf32>, i32 -> vector<8x256xf32>
    %c1 = arith.constant 1 : index
    %c0_4 = arith.constant 0 : index
    %7 = vector.load %arg1[%c1, %c0_4] : memref<9x256xf32, #tpu.memory_space<vmem>>, vector<1x256xf32>
    %8 = vector.broadcast %7 : vector<1x256xf32> to vector<8x256xf32>
    %9 = arith.mulf %6, %8 : vector<8x256xf32>
    %c15_i32 = arith.constant 15 : i32
    %10 = tpu.dynamic_rotate %1 by %c15_i32 dim 1 : vector<8x256xf32>, i32 -> vector<8x256xf32>
    %c2 = arith.constant 2 : index
    %c0_5 = arith.constant 0 : index
    %11 = vector.load %arg1[%c2, %c0_5] : memref<9x256xf32, #tpu.memory_space<vmem>>, vector<1x256xf32>
    %12 = vector.broadcast %11 : vector<1x256xf32> to vector<8x256xf32>
    %13 = arith.mulf %10, %12 : vector<8x256xf32>
    %c1_i32 = arith.constant 1 : i32
    %14 = tpu.dynamic_rotate %1 by %c1_i32 dim 1 : vector<8x256xf32>, i32 -> vector<8x256xf32>
    %c3 = arith.constant 3 : index
    %c0_6 = arith.constant 0 : index
    %15 = vector.load %arg1[%c3, %c0_6] : memref<9x256xf32, #tpu.memory_space<vmem>>, vector<1x256xf32>
    %16 = vector.broadcast %15 : vector<1x256xf32> to vector<8x256xf32>
    %17 = arith.mulf %14, %16 : vector<8x256xf32>
    %c255_i32 = arith.constant 255 : i32
    %18 = tpu.dynamic_rotate %1 by %c255_i32 dim 1 : vector<8x256xf32>, i32 -> vector<8x256xf32>
    %c5 = arith.constant 5 : index
    %c0_7 = arith.constant 0 : index
    %19 = vector.load %arg1[%c5, %c0_7] : memref<9x256xf32, #tpu.memory_space<vmem>>, vector<1x256xf32>
    %20 = vector.broadcast %19 : vector<1x256xf32> to vector<8x256xf32>
    %21 = arith.mulf %18, %20 : vector<8x256xf32>
    %c241_i32 = arith.constant 241 : i32
    %22 = tpu.dynamic_rotate %1 by %c241_i32 dim 1 : vector<8x256xf32>, i32 -> vector<8x256xf32>
    %c6 = arith.constant 6 : index
    %c0_8 = arith.constant 0 : index
    %23 = vector.load %arg1[%c6, %c0_8] : memref<9x256xf32, #tpu.memory_space<vmem>>, vector<1x256xf32>
    %24 = vector.broadcast %23 : vector<1x256xf32> to vector<8x256xf32>
    %25 = arith.mulf %22, %24 : vector<8x256xf32>
    %c240_i32 = arith.constant 240 : i32
    %26 = tpu.dynamic_rotate %1 by %c240_i32 dim 1 : vector<8x256xf32>, i32 -> vector<8x256xf32>
    %c7 = arith.constant 7 : index
    %c0_9 = arith.constant 0 : index
    %27 = vector.load %arg1[%c7, %c0_9] : memref<9x256xf32, #tpu.memory_space<vmem>>, vector<1x256xf32>
    %28 = vector.broadcast %27 : vector<1x256xf32> to vector<8x256xf32>
    %29 = arith.mulf %26, %28 : vector<8x256xf32>
    %c239_i32 = arith.constant 239 : i32
    %30 = tpu.dynamic_rotate %1 by %c239_i32 dim 1 : vector<8x256xf32>, i32 -> vector<8x256xf32>
    %c8 = arith.constant 8 : index
    %c0_10 = arith.constant 0 : index
    %31 = vector.load %arg1[%c8, %c0_10] : memref<9x256xf32, #tpu.memory_space<vmem>>, vector<1x256xf32>
    %32 = vector.broadcast %31 : vector<1x256xf32> to vector<8x256xf32>
    %33 = arith.mulf %30, %32 : vector<8x256xf32>
    %34 = tpu.concatenate %5, %9, %13, %17, %1, %21, %25, %29, %33 in 0 : vector<8x256xf32>, vector<8x256xf32>, vector<8x256xf32>, vector<8x256xf32>, vector<8x256xf32>, vector<8x256xf32>, vector<8x256xf32>, vector<8x256xf32>, vector<8x256xf32> -> vector<72x256xf32>
    %c0_11 = arith.constant 0 : index
    %c0_12 = arith.constant 0 : index
    %35 = vector.load %arg3[%c0_11, %c0_12] : memref<2x72xf32, #tpu.memory_space<vmem>>, vector<2x72xf32>
    %cst = arith.constant dense<0.000000e+00> : vector<2x256xf32>
    %36 = tpu.matmul %35, %34, %cst {dimension_numbers = #tpu.dot_dimension_numbers<[1], [0], [0], [1], [0, 0, 1, 1], [], []>} : vector<2x72xf32>, vector<72x256xf32>, vector<2x256xf32> -> vector<2x256xf32>
    %c0_13 = arith.constant 0 : index
    %c0_14 = arith.constant 0 : index
    %37 = vector.load %arg4[%c0_13, %c0_14] : memref<2x1xf32, #tpu.memory_space<vmem>>, vector<2x1xf32>
    %38 = vector.broadcast %37 : vector<2x1xf32> to vector<2x256xf32>
    %39 = arith.addf %36, %38 : vector<2x256xf32>
    %cst_15 = arith.constant 0.000000e+00 : f32
    %40 = vector.broadcast %cst_15 : f32 to vector<2x256xf32>
    %41 = arith.maximumf %39, %40 : vector<2x256xf32>
    %c0_16 = arith.constant 0 : index
    %c0_17 = arith.constant 0 : index
    %42 = vector.load %arg5[%c0_16, %c0_17] : memref<1x2xf32, #tpu.memory_space<vmem>>, vector<1x1xf32>
    %43 = vector.extract_strided_slice %41 {offsets = [0, 0], sizes = [1, 256], strides = [1, 1]} : vector<2x256xf32> to vector<1x256xf32>
    %44 = vector.broadcast %42 : vector<1x1xf32> to vector<1x256xf32>
    %45 = arith.mulf %44, %43 : vector<1x256xf32>
    %c0_18 = arith.constant 0 : index
    %c1_19 = arith.constant 1 : index
    %46 = vector.load %arg5[%c0_18, %c1_19] : memref<1x2xf32, #tpu.memory_space<vmem>>, vector<1x1xf32>
    %47 = vector.extract_strided_slice %41 {offsets = [1, 0], sizes = [1, 256], strides = [1, 1]} : vector<2x256xf32> to vector<1x256xf32>
    %48 = vector.broadcast %46 : vector<1x1xf32> to vector<1x256xf32>
    %49 = arith.mulf %48, %47 : vector<1x256xf32>
    %50 = arith.addf %45, %49 : vector<1x256xf32>
    %c0_20 = arith.constant 0 : index
    %c0_21 = arith.constant 0 : index
    %51 = vector.load %arg6[%c0_20, %c0_21] : memref<1x1xf32, #tpu.memory_space<vmem>>, vector<1x1xf32>
    %52 = vector.broadcast %51 : vector<1x1xf32> to vector<1x256xf32>
    %53 = arith.addf %50, %52 : vector<1x256xf32>
    %54 = vector.shape_cast %53 : vector<1x256xf32> to vector<1x1x256xf32>
    %c0_22 = arith.constant 0 : index
    %c0_23 = arith.constant 0 : index
    %c0_24 = arith.constant 0 : index
    %55 = vector.load %arg7[%c0_22, %c0_23, %c0_24] : memref<1x1x256xf32, #tpu.memory_space<vmem>>, vector<1x1x256xf32>
    tpu.vector_store %arg7[%c0_22, %c0_23, %c0_24], %54 {strides = array<i32>} : memref<1x1x256xf32, #tpu.memory_space<vmem>>, vector<1x1x256xf32>,
    return
  }
  func.func @transform_0(%arg0: i32) -> (i32, i32) {
    %c0_i32 = arith.constant 0 : i32
    %c0_i32_0 = arith.constant 0 : i32
    %c0_i32_1 = arith.constant 0 : i32
    return %c0_i32, %c0_i32_0 : i32, i32
  }
  func.func @transform_1(%arg0: i32) -> (i32, i32, i32) {
    %c0_i32 = arith.constant 0 : i32
    %c0_i32_0 = arith.constant 0 : i32
    %c0_i32_1 = arith.constant 0 : i32
    return %arg0, %c0_i32, %c0_i32_0 : i32, i32, i32
  }
  func.func @transform_2(%arg0: i32) -> (i32, i32) {
    %c0_i32 = arith.constant 0 : i32
    %c0_i32_0 = arith.constant 0 : i32
    %c0_i32_1 = arith.constant 0 : i32
    return %c0_i32, %c0_i32_0 : i32, i32
  }
  func.func @transform_3(%arg0: i32) -> (i32, i32) {
    %c0_i32 = arith.constant 0 : i32
    %c0_i32_0 = arith.constant 0 : i32
    %c0_i32_1 = arith.constant 0 : i32
    return %c0_i32, %c0_i32_0 : i32, i32
  }
  func.func @transform_4(%arg0: i32) -> (i32, i32) {
    %c0_i32 = arith.constant 0 : i32
    %c0_i32_0 = arith.constant 0 : i32
    %c0_i32_1 = arith.constant 0 : i32
    return %c0_i32, %c0_i32_0 : i32, i32
  }
  func.func @transform_5(%arg0: i32) -> (i32, i32) {
    %c0_i32 = arith.constant 0 : i32
    %c0_i32_0 = arith.constant 0 : i32
    %c0_i32_1 = arith.constant 0 : i32
    return %c0_i32, %c0_i32_0 : i32, i32
  }
  func.func @transform_6(%arg0: i32) -> (i32, i32, i32) {
    %c0_i32 = arith.constant 0 : i32
    %c0_i32_0 = arith.constant 0 : i32
    %c0_i32_1 = arith.constant 0 : i32
    return %arg0, %c0_i32, %c0_i32_0 : i32, i32, i32
  }
}

</mosaic_0001>

<llo_original>
// kernel: tpu_custom_call.1
$region0: #{tpu_custom_call.1}
  #allocation0 [shape = 'u32[]', space=smem, size = 0x4, offset = 0x4, fixed_abs, tag = 'smem constant byte address 0x4 - core index']
  #allocation1 [shape = 'u32[144,128]{1,0:T(1,128)}', space=vmem, size = 0x12000, scoped, tag = 'internal scratch']
  #allocation2 [shape = 'f32[1,1]{1,0:T(1,128)S(1)}', space=vmem, size = 0x200, scoped, tag = 'scoped memory for tpu_custom_call.1']
  %s0 = inlined_call_operand.hbm [shape: f32[9,256], index: 0, kind: input, shape index: {}]
  %s1 = inlined_call_operand.hbm [shape: f32[2,8,256], index: 1, kind: input, shape index: {}]
  %s2 = inlined_call_operand.vmem [shape: f32[2,72], index: 2, kind: input, shape index: {}]
  %s3 = inlined_call_operand.vmem [shape: f32[2,1], index: 3, kind: input, shape index: {}]
  %s4 = inlined_call_operand.vmem [shape: f32[1,2], index: 4, kind: input, shape index: {}]
  %s5 = inlined_call_operand.<no memory space> [shape: f32[1,1], index: 5, kind: input, shape index: {}]
  %s6 = inlined_call_operand.hbm [shape: f32[2,1,256], index: 6, kind: output, shape index: {}]
  %s7 = sld [smem:[#allocation0]]
  $region65: #{tpu_custom_call.1} parent=0
    _
  %s9 = ssub.s32 1, %s7
  %s10 = scalar_select 0, %s9, %s7
  %v11 = vstv %s5
  %12 = vst [vmem:[#allocation2] sm:$0x1] %v11
  $region1: #{tpu_custom_call.1} parent=0
    #allocation3 [shape = 'u8[16384]{0}', space=vmem, size = 0x4000, scoped, tag = 'input window, operand 0, single buffered']
    #allocation4 [shape = 's32[2]{0}', space=sflag, size = 0x8, scoped, tag = 'scoped memory for tpu_custom_call.1']
    #allocation5 [shape = 's32[2]{0}', space=sflag, size = 0x8, scoped, tag = 'scoped memory for tpu_custom_call.1']
    #allocation6 [shape = 'u8[16384]{0}', space=vmem, size = 0x4000, scoped, tag = 'input window, operand 1']
    #allocation7 [shape = 's32[2]{0}', space=sflag, size = 0x8, scoped, tag = 'scoped memory for tpu_custom_call.1']
    #allocation8 [shape = 'u8[2048]{0}', space=vmem, size = 0x800, scoped, tag = 'output window, operand 0']
    %13 = vsyncpa [#allocation4], 0
    %14 = vsyncpa [#allocation7], 0
    %s15 = scalar_lea.sflag [#allocation7], 1
    %16 = vsyncpa %s15, 0
    %17 = vsyncpa [#allocation5], 0
    %s18 = scalar_lea.sflag [#allocation5], 1
    %19 = vsyncpa %s18, 0
    loop: start=0, step=1, limit=4
    $region2: #{tpu_custom_call.1} parent=1 // loop_pre_header
      _
    $region3: #{tpu_custom_call.1} parent=1 // loop_header
      %s21 = sphi 0, %s25
      %p22 = scmp.ge.s32.totalorder %s21, 4
      %s29 = sphi 0, %s29
      %s31 = sphi 0, %s29
      %s32 = sphi 0, %s31
      %s46 = sphi 0, %s32
      %s52 = sphi 0, %s54
      %s55 = sphi 0, %s52
      %s56 = sphi 0, %s55
      %s72 = sphi 0, %s56
      %s76 = sphi 0, %s76
      %s78 = sphi 0, %s76
      %s79 = sphi 0, %s78
      %s93 = sphi 0, %s79
      %s97 = sphi 0, %s97
      %s99 = sphi 0, %s97
      %s100 = sphi 0, %s99
      %s114 = sphi 0, %s100
      %s118 = sphi 0, %s118
      %s120 = sphi 0, %s118
      %s121 = sphi 0, %s120
      %s135 = sphi 0, %s121
      %s139 = sphi 0, %s139
      %s141 = sphi 0, %s139
      %s142 = sphi 0, %s141
      %s156 = sphi 0, %s142
      %s162 = sphi 0, %s164
      %s165 = sphi 0, %s162
      %s166 = sphi 0, %s165
      %s182 = sphi 0, %s166
    $region4: #{tpu_custom_call.1} parent=1 // loop_header_branch
      %24 = sbr.rel (%p22) target = $region8
    $region5: #{tpu_custom_call.1} parent=1 // loop_body
      %s26 = ssub.s32 %s21, 1
      %s27 = ssub.s32 %s21, 2
      %s28 = sadd.s32 %s21, 1
      %s30 = sadd.s32 %s29, 1
      %p33 = scmp.eq.s32.totalorder %s21, 1
      %p34 = scmp.ne.s32.totalorder %s29, %s31
      %p35 = scmp.eq.s32.totalorder %s21, 0
      %p36 = por %p34, %p35
      %p37 = scmp.ne.s32.totalorder %s29, %s31
      %p38 = scmp.eq.s32.totalorder %s26, 1
      %p39 = por %p37, %p38
      %p40 = scmp.ne.s32.totalorder %s31, %s32
      %p41 = scmp.eq.s32.totalorder %s26, 0
      %p42 = por %p40, %p41
      %p43 = scmp.ne.s32.totalorder %s31, %s32
      %p44 = scmp.eq.s32.totalorder %s27, 1
      %p45 = por %p43, %p44
      %p47 = scmp.ne.s32.totalorder %s32, %s46
      %p48 = scmp.eq.s32.totalorder %s27, 0
      %p49 = por %p47, %p48
      %s50 = ssub.s32 %s21, %s28
      %p51 = scmp.eq.s32.totalorder %s50, 0
      %s53 = sadd.s32 %s52, 1
      %s54 = scalar_select %p51, %s52, %s53
      %p57 = pneg %p51
      %p58 = scmp.eq.s32.totalorder %s21, 1
      %p59 = por %p57, %p58
      %p60 = scmp.ne.s32.totalorder %s52, %s55
      %p61 = scmp.eq.s32.totalorder %s21, 0
      %p62 = por %p60, %p61
      %p63 = scmp.ne.s32.totalorder %s52, %s55
      %p64 = scmp.eq.s32.totalorder %s26, 1
      %p65 = por %p63, %p64
      %p66 = scmp.ne.s32.totalorder %s55, %s56
      %p67 = scmp.eq.s32.totalorder %s26, 0
      %p68 = por %p66, %p67
      %p69 = scmp.ne.s32.totalorder %s55, %s56
      %p70 = scmp.eq.s32.totalorder %s27, 1
      %p71 = por %p69, %p70
      %p73 = scmp.ne.s32.totalorder %s56, %s72
      %p74 = scmp.eq.s32.totalorder %s27, 0
      %p75 = por %p73, %p74
      %s77 = sadd.s32 %s76, 1
      %p80 = scmp.eq.s32.totalorder %s21, 1
      %p81 = scmp.ne.s32.totalorder %s76, %s78
      %p82 = scmp.eq.s32.totalorder %s21, 0
      %p83 = por %p81, %p82
      %p84 = scmp.ne.s32.totalorder %s76, %s78
      %p85 = scmp.eq.s32.totalorder %s26, 1
      %p86 = por %p84, %p85
      %p87 = scmp.ne.s32.totalorder %s78, %s79
      %p88 = scmp.eq.s32.totalorder %s26, 0
      %p89 = por %p87, %p88
      %p90 = scmp.ne.s32.totalorder %s78, %s79
      %p91 = scmp.eq.s32.totalorder %s27, 1
      %p92 = por %p90, %p91
      %p94 = scmp.ne.s32.totalorder %s79, %s93
      %p95 = scmp.eq.s32.totalorder %s27, 0
      %p96 = por %p94, %p95
      %s98 = sadd.s32 %s97, 1
      %p101 = scmp.eq.s32.totalorder %s21, 1
      %p102 = scmp.ne.s32.totalorder %s97, %s99
      %p103 = scmp.eq.s32.totalorder %s21, 0
      %p104 = por %p102, %p103
      %p105 = scmp.ne.s32.totalorder %s97, %s99
      %p106 = scmp.eq.s32.totalorder %s26, 1
      %p107 = por %p105, %p106
      %p108 = scmp.ne.s32.totalorder %s99, %s100
      %p109 = scmp.eq.s32.totalorder %s26, 0
      %p110 = por %p108, %p109
      %p111 = scmp.ne.s32.totalorder %s99, %s100
      %p112 = scmp.eq.s32.totalorder %s27, 1
      %p113 = por %p111, %p112
      %p115 = scmp.ne.s32.totalorder %s100, %s114
      %p116 = scmp.eq.s32.totalorder %s27, 0
      %p117 = por %p115, %p116
      %s119 = sadd.s32 %s118, 1
      %p122 = scmp.eq.s32.totalorder %s21, 1
      %p123 = scmp.ne.s32.totalorder %s118, %s120
      %p124 = scmp.eq.s32.totalorder %s21, 0
      %p125 = por %p123, %p124
      %p126 = scmp.ne.s32.totalorder %s118, %s120
      %p127 = scmp.eq.s32.totalorder %s26, 1
      %p128 = por %p126, %p127
      %p129 = scmp.ne.s32.totalorder %s120, %s121
      %p130 = scmp.eq.s32.totalorder %s26, 0
      %p131 = por %p129, %p130
      %p132 = scmp.ne.s32.totalorder %s120, %s121
      %p133 = scmp.eq.s32.totalorder %s27, 1
      %p134 = por %p132, %p133
      %p136 = scmp.ne.s32.totalorder %s121, %s135
      %p137 = scmp.eq.s32.totalorder %s27, 0
      %p138 = por %p136, %p137
      %s140 = sadd.s32 %s139, 1
      %p143 = scmp.eq.s32.totalorder %s21, 1
      %p144 = scmp.ne.s32.totalorder %s139, %s141
      %p145 = scmp.eq.s32.totalorder %s21, 0
      %p146 = por %p144, %p145
      %p147 = scmp.ne.s32.totalorder %s139, %s141
      %p148 = scmp.eq.s32.totalorder %s26, 1
      %p149 = por %p147, %p148
      %p150 = scmp.ne.s32.totalorder %s141, %s142
      %p151 = scmp.eq.s32.totalorder %s26, 0
      %p152 = por %p150, %p151
      %p153 = scmp.ne.s32.totalorder %s141, %s142
      %p154 = scmp.eq.s32.totalorder %s27, 1
      %p155 = por %p153, %p154
      %p157 = scmp.ne.s32.totalorder %s142, %s156
      %p158 = scmp.eq.s32.totalorder %s27, 0
      %p159 = por %p157, %p158
      %s160 = ssub.s32 %s21, %s28
      %p161 = scmp.eq.s32.totalorder %s160, 0
      %s163 = sadd.s32 %s162, 1
      %s164 = scalar_select %p161, %s162, %s163
      %p167 = pneg %p161
      %p168 = scmp.eq.s32.totalorder %s21, 1
      %p169 = por %p167, %p168
      %p170 = scmp.ne.s32.totalorder %s162, %s165
      %p171 = scmp.eq.s32.totalorder %s21, 0
      %p172 = por %p170, %p171
      %p173 = scmp.ne.s32.totalorder %s162, %s165
      %p174 = scmp.eq.s32.totalorder %s26, 1
      %p175 = por %p173, %p174
      %p176 = scmp.ne.s32.totalorder %s165, %s166
      %p177 = scmp.eq.s32.totalorder %s26, 0
      %p178 = por %p176, %p177
      %p179 = scmp.ne.s32.totalorder %s165, %s166
      %p180 = scmp.eq.s32.totalorder %s27, 1
      %p181 = por %p179, %p180
      %p183 = scmp.ne.s32.totalorder %s166, %s182
      %p184 = scmp.eq.s32.totalorder %s27, 0
      %p185 = por %p183, %p184
      %p186 = scmp.le.s32.totalorder 1, %s21
      %p187 = scmp.lt.s32.totalorder %s21, 3
      %p188 = pnand %p186, %p187
      %p189 = pneg %p188
      // Predicated region
      $region9: #{tpu_custom_call.1} parent=5 // pred_check
        _
      $region10: #{tpu_custom_call.1} parent=5 // pred_check_branch
        %191 = sbr.rel (%p188) target = $region12
      $region11: #{tpu_custom_call.1} parent=5 // pred_region
        %s192 = ssub.s32 %s21, 1
        // Predicated region
        $region13: #{tpu_custom_call.1} parent=11 // pred_check
          %p193 = pneg %p42
        $region14: #{tpu_custom_call.1} parent=11 // pred_check_branch
          %195 = sbr.rel (%p193) target = $region16
        $region15: #{tpu_custom_call.1} parent=11 // pred_region
          %s197 = ssub.s32 512, 512
          %198 = vsyncadd [#allocation4], %s197
          %s199 = sshll.u32 [#allocation3], 4
          %s200 = int_to_ptr.vmem [resolvable:$true] %s199
          %205 = dma.hbm_to_vmem [thread:$0]  %s0, 512, %s200, [#allocation4], 256, 256, 16
        $region16: #{tpu_custom_call.1} parent=11 // pred_fallthru
          _
        // Predicated region
        $region17: #{tpu_custom_call.1} parent=11 // pred_check
          %p206 = pneg %p89
        $region18: #{tpu_custom_call.1} parent=11 // pred_check_branch
          %208 = sbr.rel (%p206) target = $region20
        $region19: #{tpu_custom_call.1} parent=11 // pred_region
          _
        $region20: #{tpu_custom_call.1} parent=11 // pred_fallthru
          _
        // Predicated region
        $region21: #{tpu_custom_call.1} parent=11 // pred_check
          %p209 = pneg %p110
        $region22: #{tpu_custom_call.1} parent=11 // pred_check_branch
          %211 = sbr.rel (%p209) target = $region24
        $region23: #{tpu_custom_call.1} parent=11 // pred_region
          _
        $region24: #{tpu_custom_call.1} parent=11 // pred_fallthru
          _
        // Predicated region
        $region25: #{tpu_custom_call.1} parent=11 // pred_check
          %p212 = pneg %p131
        $region26: #{tpu_custom_call.1} parent=11 // pred_check_branch
          %214 = sbr.rel (%p212) target = $region28
        $region27: #{tpu_custom_call.1} parent=11 // pred_region
          _
        $region28: #{tpu_custom_call.1} parent=11 // pred_fallthru
          _
        // Predicated region
        $region29: #{tpu_custom_call.1} parent=11 // pred_check
          %p215 = pneg %p152
        $region30: #{tpu_custom_call.1} parent=11 // pred_check_branch
          %217 = sbr.rel (%p215) target = $region32
        $region31: #{tpu_custom_call.1} parent=11 // pred_region
          _
        $region32: #{tpu_custom_call.1} parent=11 // pred_fallthru
          _
      $region12: #{tpu_custom_call.1} parent=5 // pred_fallthru
        _
      %p218 = scmp.lt.s32.totalorder %s21, 2
      // Predicated region
      $region33: #{tpu_custom_call.1} parent=5 // pred_check
        %p219 = pneg %p218
      $region34: #{tpu_custom_call.1} parent=5 // pred_check_branch
        %221 = sbr.rel (%p219) target = $region36
      $region35: #{tpu_custom_call.1} parent=5 // pred_region
        // Predicated region
        $region37: #{tpu_custom_call.1} parent=35 // pred_check
          %p222 = pneg %p62
        $region38: #{tpu_custom_call.1} parent=35 // pred_check_branch
          %224 = sbr.rel (%p222) target = $region40
        $region39: #{tpu_custom_call.1} parent=35 // pred_region
          %s225 = sand.u32 %s52, 1
          %s226 = scalar_lea.sflag [#allocation7], %s225
          %s227 = sand.u32 %s52, 1
          %s228 = smul.addr %s227, 16
          %s229 = scalar_lea.vmem [#allocation6], %s228
          %s231 = ssub.s32 256, 256
          %232 = vsyncadd %s226, %s231
          %s233 = smul.addr %s21, 2
          %s234 = smul.addr %s233, 128
          %s235 = scalar_lea.hbm %s1, %s234
          %s237 = sshll.u32 %s229, 4
          %s238 = int_to_ptr.vmem [resolvable:$true] %s237
          %240 = dma.hbm_to_vmem [thread:$0]  %s235, 256, %s238, %s226
        $region40: #{tpu_custom_call.1} parent=35 // pred_fallthru
          _
      $region36: #{tpu_custom_call.1} parent=5 // pred_fallthru
        _
      %p241 = scmp.le.s32.totalorder 1, %s21
      %p242 = scmp.lt.s32.totalorder %s21, 3
      %p243 = pnand %p241, %p242
      %p244 = pneg %p243
      // Predicated region
      $region41: #{tpu_custom_call.1} parent=5 // pred_check
        _
      $region42: #{tpu_custom_call.1} parent=5 // pred_check_branch
        %246 = sbr.rel (%p243) target = $region44
      $region43: #{tpu_custom_call.1} parent=5 // pred_region
        %s247 = ssub.s32 %s21, 1
        // Predicated region
        $region45: #{tpu_custom_call.1} parent=43 // pred_check
          %p248 = pneg %p42
        $region46: #{tpu_custom_call.1} parent=43 // pred_check_branch
          %250 = sbr.rel (%p248) target = $region48
        $region47: #{tpu_custom_call.1} parent=43 // pred_region
          %251 = dma.done [#allocation4], 512
        $region48: #{tpu_custom_call.1} parent=43 // pred_fallthru
          _
        %s252 = sand.u32 %s55, 1
        %s253 = scalar_lea.sflag [#allocation7], %s252
        %s254 = sand.u32 %s55, 1
        %s255 = smul.addr %s254, 16
        %s256 = scalar_lea.vmem [#allocation6], %s255
        // Predicated region
        $region49: #{tpu_custom_call.1} parent=43 // pred_check
          %p257 = pneg %p68
        $region50: #{tpu_custom_call.1} parent=43 // pred_check_branch
          %259 = sbr.rel (%p257) target = $region52
        $region51: #{tpu_custom_call.1} parent=43 // pred_region
          %260 = dma.done %s253, 256
        $region52: #{tpu_custom_call.1} parent=43 // pred_fallthru
          _
        %p261 = pneg %p42
        %p262 = pneg %p39
        %s263 = sand.u32 %s55, 1
        %s264 = scalar_lea.sflag [#allocation7], %s263
        %s265 = sand.u32 %s55, 1
        %s266 = smul.addr %s265, 16
        %s267 = scalar_lea.vmem [#allocation6], %s266
        %p268 = pneg %p68
        %p269 = pneg %p65
        %p270 = pneg %p89
        %p271 = pneg %p86
        %p272 = pneg %p110
        %p273 = pneg %p107
        %p274 = pneg %p131
        %p275 = pneg %p128
        %p276 = pneg %p152
        %p277 = pneg %p149
        %p278 = pneg %p178
        %p279 = pneg %p175
        %s280 = sand.u32 %s165, 1
        %s281 = scalar_lea.sflag [#allocation5], %s280
        %s282 = sand.u32 %s165, 1
        %s283 = smul.addr %s282, 2
        %s284 = scalar_lea.vmem [#allocation8], %s283
        %v285 = vld [vmem:[%s256] sm:$0xff]
        %v286 = vld [vmem:[%s256 + $0x8] sm:$0xff]
        %287 = vrot.lane.b32.xlu0 %v285, 17
        %v288 = vpop.permute.xlu0 %287
        %289 = vrot.lane.b32.xlu0 %v286, 17
        %v290 = vpop.permute.xlu0 %289
        %v291 = vlaneseq
        %v292 = vand.u32 %v291, 127
        %vm293 = vcmp.lt.s32.totalorder %v292, 17
        %v294 = vsel %vm293, %v288, %v290
        %v295 = vsel %vm293, %v290, %v288
        %v296 = vld [vmem:[#allocation3] ss:$8 sm:$0x3]
        %v298 = vlaneseq
        %v299 = vshrl.u32 %v298, 7
        %v300 = vsub.s32 0, %v299
        %v301 = vrot.slane %v296, %v300
        %v302 = vlaneseq
        %v303 = vshrl.u32 %v302, 7
        %v304 = vsub.s32 1, %v303
        %v305 = vrot.slane %v296, %v304
        %v308 = vmul.f32 %v295, %v301
        %v309 = vmul.f32 %v294, %v305
        %310 = vrot.lane.b32.xlu0 %v285, 16
        %v311 = vpop.permute.xlu0 %310
        %312 = vrot.lane.b32.xlu0 %v286, 16
        %v313 = vpop.permute.xlu0 %312
        %vm314 = vcmp.lt.s32.totalorder %v292, 16
        %v315 = vsel %vm314, %v311, %v313
        %v316 = vsel %vm314, %v313, %v311
        %s317 = scalar_lea.vmem [#allocation3], 1
        %v318 = vld [vmem:[%s317] ss:$8 sm:$0x3]
        %v320 = vlaneseq
        %v321 = vshrl.u32 %v320, 7
        %v322 = vsub.s32 0, %v321
        %v323 = vrot.slane %v318, %v322
        %v324 = vlaneseq
        %v325 = vshrl.u32 %v324, 7
        %v326 = vsub.s32 1, %v325
        %v327 = vrot.slane %v318, %v326
        %v330 = vmul.f32 %v316, %v323
        %v331 = vmul.f32 %v315, %v327
        %332 = vrot.lane.b32.xlu0 %v285, 15
        %v333 = vpop.permute.xlu0 %332
        %334 = vrot.lane.b32.xlu0 %v286, 15
        %v335 = vpop.permute.xlu0 %334
        %vm336 = vcmp.lt.s32.totalorder %v292, 15
        %v337 = vsel %vm336, %v333, %v335
        %v338 = vsel %vm336, %v335, %v333
        %s339 = scalar_lea.vmem [#allocation3], 2
        %v340 = vld [vmem:[%s339] ss:$8 sm:$0x3]
        %v342 = vlaneseq
        %v343 = vshrl.u32 %v342, 7
        %v344 = vsub.s32 0, %v343
        %v345 = vrot.slane %v340, %v344
        %v346 = vlaneseq
        %v347 = vshrl.u32 %v346, 7
        %v348 = vsub.s32 1, %v347
        %v349 = vrot.slane %v340, %v348
        %v352 = vmul.f32 %v338, %v345
        %v353 = vmul.f32 %v337, %v349
        %354 = vrot.lane.b32.xlu0 %v285, 1
        %v355 = vpop.permute.xlu0 %354
        %356 = vrot.lane.b32.xlu0 %v286, 1
        %v357 = vpop.permute.xlu0 %356
        %vm358 = vcmp.lt.s32.totalorder %v292, 1
        %v359 = vsel %vm358, %v355, %v357
        %v360 = vsel %vm358, %v357, %v355
        %s361 = scalar_lea.vmem [#allocation3], 3
        %v362 = vld [vmem:[%s361] ss:$8 sm:$0x3]
        %v364 = vlaneseq
        %v365 = vshrl.u32 %v364, 7
        %v366 = vsub.s32 0, %v365
        %v367 = vrot.slane %v362, %v366
        %v368 = vlaneseq
        %v369 = vshrl.u32 %v368, 7
        %v370 = vsub.s32 1, %v369
        %v371 = vrot.slane %v362, %v370
        %v374 = vmul.f32 %v360, %v367
        %v375 = vmul.f32 %v359, %v371
        %376 = vrot.lane.b32.xlu0 %v285, 127
        %v377 = vpop.permute.xlu0 %376
        %378 = vrot.lane.b32.xlu0 %v286, 127
        %v379 = vpop.permute.xlu0 %378
        %vm380 = vcmp.lt.s32.totalorder %v292, 127
        %v381 = vsel %vm380, %v377, %v379
        %v382 = vsel %vm380, %v379, %v377
        %s383 = scalar_lea.vmem [#allocation3], 5
        %v384 = vld [vmem:[%s383] ss:$8 sm:$0x3]
        %v386 = vlaneseq
        %v387 = vshrl.u32 %v386, 7
        %v388 = vsub.s32 0, %v387
        %v389 = vrot.slane %v384, %v388
        %v390 = vlaneseq
        %v391 = vshrl.u32 %v390, 7
        %v392 = vsub.s32 1, %v391
        %v393 = vrot.slane %v384, %v392
        %v396 = vmul.f32 %v381, %v389
        %v397 = vmul.f32 %v382, %v393
        %398 = vrot.lane.b32.xlu0 %v285, 113
        %v399 = vpop.permute.xlu0 %398
        %400 = vrot.lane.b32.xlu0 %v286, 113
        %v401 = vpop.permute.xlu0 %400
        %vm402 = vcmp.lt.s32.totalorder %v292, 113
        %v403 = vsel %vm402, %v399, %v401
        %v404 = vsel %vm402, %v401, %v399
        %s405 = scalar_lea.vmem [#allocation3], 6
        %v406 = vld [vmem:[%s405] ss:$8 sm:$0x3]
        %v408 = vlaneseq
        %v409 = vshrl.u32 %v408, 7
        %v410 = vsub.s32 0, %v409
        %v411 = vrot.slane %v406, %v410
        %v412 = vlaneseq
        %v413 = vshrl.u32 %v412, 7
        %v414 = vsub.s32 1, %v413
        %v415 = vrot.slane %v406, %v414
        %v418 = vmul.f32 %v403, %v411
        %v419 = vmul.f32 %v404, %v415
        %420 = vrot.lane.b32.xlu0 %v285, 112
        %v421 = vpop.permute.xlu0 %420
        %422 = vrot.lane.b32.xlu0 %v286, 112
        %v423 = vpop.permute.xlu0 %422
        %vm424 = vcmp.lt.s32.totalorder %v292, 112
        %v425 = vsel %vm424, %v421, %v423
        %v426 = vsel %vm424, %v423, %v421
        %s427 = scalar_lea.vmem [#allocation3], 7
        %v428 = vld [vmem:[%s427] ss:$8 sm:$0x3]
        %v430 = vlaneseq
        %v431 = vshrl.u32 %v430, 7
        %v432 = vsub.s32 0, %v431
        %v433 = vrot.slane %v428, %v432
        %v434 = vlaneseq
        %v435 = vshrl.u32 %v434, 7
        %v436 = vsub.s32 1, %v435
        %v437 = vrot.slane %v428, %v436
        %v440 = vmul.f32 %v425, %v433
        %v441 = vmul.f32 %v426, %v437
        %442 = vrot.lane.b32.xlu0 %v285, 111
        %v443 = vpop.permute.xlu0 %442
        %444 = vrot.lane.b32.xlu0 %v286, 111
        %v445 = vpop.permute.xlu0 %444
        %vm446 = vcmp.lt.s32.totalorder %v292, 111
        %v447 = vsel %vm446, %v443, %v445
        %v448 = vsel %vm446, %v445, %v443
        %s449 = scalar_lea.vmem [#allocation3], 16
        %v450 = vld [vmem:[%s449] ss:$8 sm:$0x3]
        %v452 = vlaneseq
        %v453 = vshrl.u32 %v452, 7
        %v454 = vsub.s32 0, %v453
        %v455 = vrot.slane %v450, %v454
        %v456 = vlaneseq
        %v457 = vshrl.u32 %v456, 7
        %v458 = vsub.s32 1, %v457
        %v459 = vrot.slane %v450, %v458
        %v462 = vmul.f32 %v447, %v455
        %v463 = vmul.f32 %v448, %v459
        %v464 = vld [vmem:[%s2] sm:$0x3]
        %v465 = vld [vmem:[%s3] sm:$0x3]
        %467 = vset.pattern.permute.xlu0 0
        %468 = vperm.xlu0 %467, %v465
        %v469 = vpop.permute.xlu0 %468
        %vm471 = vcmask 588800
        %v473 = vsel %vm471, %v464, 0
        %475 = vmatprep.subr.mxu0 %v309
        %476 = vmatpush1.msra.mxu0 %v308
        %477 = vmatprep.subr.mxu0 %v331
        %478 = vmatpush1.msra.mxu0 %v330
        %479 = vmatprep.subr.mxu0 %v353
        %480 = vmatpush1.msra.mxu0 %v352
        %481 = vmatprep.subr.mxu0 %v375
        %482 = vmatpush1.msra.mxu0 %v374
        %483 = vmatprep.subr.mxu0 %v286
        %484 = vmatpush1.msra.mxu0 %v285
        %485 = vmatprep.subr.mxu0 %v397
        %486 = vmatpush1.msra.mxu0 %v396
        %487 = vmatprep.subr.mxu0 %v419
        %488 = vmatpush1.msra.mxu0 %v418
        %489 = vmatprep.subr.mxu0 %v441
        %490 = vmatpush1.msra.mxu0 %v440
        %491 = vmatprep.subr.mxu0 %v463
        %492 = vmatpush1.msra.mxu0 %v462
        %493 = vmatprep.subr.mxu0 0.0
        %494 = vmatpush1.msra.mxu0 0.0
        %495 = vmatprep.subr.mxu0 0.0
        %496 = vmatpush1.msra.mxu0 0.0
        %497 = vmatprep.subr.mxu0 0.0
        %498 = vmatpush1.msra.mxu0 0.0
        %499 = vmatprep.subr.mxu0 0.0
        %500 = vmatpush1.msra.mxu0 0.0
        %501 = vmatprep.subr.mxu0 0.0
        %502 = vmatpush1.msra.mxu0 0.0
        %503 = vmatprep.subr.mxu0 0.0
        %504 = vmatpush1.msra.mxu0 0.0
        %505 = vmatprep.subr.mxu0 0.0
        %506 = vmatpush1.msra.mxu0 0.0
        %507 = vmatprep.subr.mxu0 0.0
        %508 = vmatpush1.msra.mxu0 0.0
        %509 = vmatprep.subr.mxu0 0.0
        %510 = vmatpush1.msra.mxu0 0.0
        %511 = vmatprep.subr.mxu0 0.0
        %512 = vmatpush1.msra.mxu0 0.0
        %513 = vmatprep.subr.mxu0 0.0
        %514 = vmatpush1.msra.mxu0 0.0
        %515 = vmatprep.subr.mxu0 0.0
        %516 = vmatpush1.msra.mxu0 0.0
        %517 = vmatprep.subr.mxu0 0.0
        %518 = vmatpush1.msra.mxu0 0.0
        %519 = vmatprep.subr.mxu0 0.0
        %520 = vmatpush1.msra.mxu0 0.0
        %521 = vmatprep.subr.mxu0 0.0
        %522 = vmatpush1.msra.mxu0 0.0
        %523 = vmatprep.subr.mxu0 0.0
        %524 = vmatpush1.msra.mxu0 0.0
        %525 = vmatprep.subr.mxu0 0.0
        %526 = vmatpush1.msra.mxu0 0.0
        %527 = vmatprep.subr.mxu0 0.0
        %528 = vmatpush1.msra.mxu0 0.0
        %529 = vmatprep.subr.mxu0 0.0
        %530 = vmatpush1.msra.mxu0 0.0
        %531 = vmatprep.subr.mxu0 0.0
        %532 = vmatpush1.msra.mxu0 0.0
        %533 = vmatprep.subr.mxu0 0.0
        %534 = vmatpush1.msra.mxu0 0.0
        %535 = vmatprep.subr.mxu0 0.0
        %536 = vmatpush1.msra.mxu0 0.0
        %537 = vmatprep.subr.mxu0 0.0
        %538 = vmatpush1.msra.mxu0 0.0
        %539 = vmatprep.mubr.f32.mxu0 0.0
        %540 = vmatmul.mubr.f32.gmra.mrb[0].mxu0 %v473
        %v541 = vpop.f32.mrb[0].mxu0
        %v542 = vadd.f32 %v469, %v541
        %v543 = vpop.f32.mrb[0].mxu0
        %v544 = vadd.f32 %v469, %v543
        %545 = vdwg.mxu0
        %v546 = vmax.f32 %v542, 0.0
        %v547 = vmax.f32 %v544, 0.0
        %v548 = vld [vmem:[%s4] sm:$0x1]
        %550 = vset.pattern.permute.xlu0 0
        %551 = vperm.xlu0 %550, %v548
        %v552 = vpop.permute.xlu0 %551
        %v554 = vlaneseq
        %v555 = vshrl.u32 %v554, 7
        %v556 = vsub.s32 0, %v555
        %v557 = vrot.slane %v552, %v556
        %v558 = vmul.f32 %v557, %v546
        %v559 = vmul.f32 %v557, %v547
        %560 = vset.pattern.permute.xlu0 1
        %561 = vperm.xlu0 %560, %v548
        %v562 = vpop.permute.xlu0 %561
        %v564 = vlaneseq
        %v565 = vshrl.u32 %v564, 7
        %v566 = vsub.s32 0, %v565
        %v567 = vrot.slane %v562, %v566
        %v568 = vmul.f32 %v567, %v546
        %v569 = vmul.f32 %v567, %v547
        %v572 = vrot.slane %v568, 1
        %v573 = vrot.slane %v569, 1
        %v576 = vadd.f32 %v558, %v572
        %v577 = vadd.f32 %v559, %v573
        %v578 = vld [vmem:[#allocation2] sm:$0x1]
        %580 = vset.pattern.permute.xlu0 0
        %581 = vperm.xlu0 %580, %v578
        %v582 = vpop.permute.xlu0 %581
        %v584 = vlaneseq
        %v585 = vshrl.u32 %v584, 7
        %v586 = vsub.s32 0, %v585
        %v587 = vrot.slane %v582, %v586
        %v588 = vadd.f32 %v576, %v587
        %v589 = vadd.f32 %v577, %v587
        %v592 = vcombine.low %v588, %v589
        %v594 = vunpack.c.l.s4 1966171168
        %v595 = vunpack.c.0.s8 %v594
        %v596 = vlaneseq
        %v597 = vshrl.u32 %v596, 7
        %v598 = vsub.s32 %v595, %v597
        %v599 = vrot.slane %v592, %v598
        %v601 = vunpack.c.l.s4 1966171168
        %v602 = vunpack.c.0.s8 %v601
        %v603 = vlaneseq
        %v604 = vshrl.u32 %v603, 7
        %v605 = vsub.s32 %v602, %v604
        %v606 = vrot.slane %v599, %v605
        %v608 = vlaneseq
        %vm609 = vcmp.ge.s32.totalorder %v608, 0
        %vm610 = vcmp.lt.s32.totalorder %v608, 256
        %vm611 = vmand %vm609, %vm610
        %612 = vst.msk [vmem:[%s284] sm:$0x3] %vm611, %v606
        %s613 = sand.u32 %s165, 1
        %s614 = scalar_lea.sflag [#allocation5], %s613
        %s615 = sand.u32 %s165, 1
        %s616 = smul.addr %s615, 2
        %s617 = scalar_lea.vmem [#allocation8], %s616
        // Predicated region
        $region53: #{tpu_custom_call.1} parent=43 // pred_check
          %p618 = pneg %p175
        $region54: #{tpu_custom_call.1} parent=43 // pred_check_branch
          %620 = sbr.rel (%p618) target = $region56
        $region55: #{tpu_custom_call.1} parent=43 // pred_region
          %s622 = ssub.s32 32, 32
          %623 = vsyncadd %s614, %s622
          %s624 = smul.addr %s26, 2
          %s625 = smul.addr %s624, 16
          %s626 = scalar_lea.hbm %s6, %s625
          %s628 = sshll.u32 %s617, 4
          %s629 = int_to_ptr.vmem [resolvable:$true] %s628
          %631 = dma.vmem_to_hbm [thread:$0]  %s629, 32, %s626, %s614
        $region56: #{tpu_custom_call.1} parent=43 // pred_fallthru
          _
      $region44: #{tpu_custom_call.1} parent=5 // pred_fallthru
        _
      %p632 = scmp.le.s32.totalorder 2, %s21
      // Predicated region
      $region57: #{tpu_custom_call.1} parent=5 // pred_check
        %p633 = pneg %p632
      $region58: #{tpu_custom_call.1} parent=5 // pred_check_branch
        %635 = sbr.rel (%p633) target = $region60
      $region59: #{tpu_custom_call.1} parent=5 // pred_region
        %s636 = ssub.s32 %s21, 2
        // Predicated region
        $region61: #{tpu_custom_call.1} parent=59 // pred_check
          %p637 = pneg %p181
        $region62: #{tpu_custom_call.1} parent=59 // pred_check_branch
          %639 = sbr.rel (%p637) target = $region64
        $region63: #{tpu_custom_call.1} parent=59 // pred_region
          %s640 = sand.u32 %s166, 1
          %s641 = scalar_lea.sflag [#allocation5], %s640
          %s642 = sand.u32 %s166, 1
          %s643 = smul.addr %s642, 2
          %s644 = scalar_lea.vmem [#allocation8], %s643
          %645 = dma.done %s641, 32
        $region64: #{tpu_custom_call.1} parent=59 // pred_fallthru
          _
      $region60: #{tpu_custom_call.1} parent=5 // pred_fallthru
        _
    $region6: #{tpu_custom_call.1} parent=1 // loop_footer
      %s25 = sadd.s32 1, %s21
    $region7: #{tpu_custom_call.1} parent=1 // loop_footer_branch
      %20 = sbr.rel target = $region3
    $region8: #{tpu_custom_call.1} parent=1 // loop_exit
      _
    %646 = vsyncpa [#allocation4], 1
    %s647 = scalar_lea.sflag [#allocation4], 1
    %648 = vsyncpa %s647, 1
    %649 = vsyncpa [#allocation7], 1
    %s650 = scalar_lea.sflag [#allocation7], 1
    %651 = vsyncpa %s650, 1
    %652 = vsyncpa [#allocation5], 1
    %s653 = scalar_lea.sflag [#allocation5], 1
    %654 = vsyncpa %s653, 1

</llo_original>
